<compile_context>
chip_gen: v5e
topology: v5e:2x2
jax: 0.10.0
libtpu: 0.0.40
codegen_flags: <defaults>
</compile_context>

<pallas_src>
import jax
import jax.numpy as jnp
from jax.experimental import pallas as pl
from jax.experimental.pallas import tpu as pltpu


def _round_up(x, m):
    return (x + m - 1) // m * m


# ----------------------------------------------------------------------------
# Pallas kernel.
# Grid = (M_tiles, K_tiles); K (flattened-image features) is the reduction.
# Inputs : x (tm, tk) f32 tile, w_vis (tk, VISP) bf16, b_vis (1, VISP) f32,
#          w_fc (VISP, EMBP) bf16, b_fc (1, EMBP) f32.
# Output : (tm, EMBP) f32 tile (resident across the K axis).
# Scratch: (tm, VISP) f32 accumulator.
# ----------------------------------------------------------------------------
def _triplet_kernel(x_ref, wv_ref, bv_ref, wf_ref, bf_ref, o_ref, acc_ref):
    k = pl.program_id(1)

    @pl.when(k == 0)
    def _init():
        acc_ref[...] = jnp.zeros_like(acc_ref)

    # In-kernel bf16 cast of the activation tile (cheap VPU op), f32 MXU acc.
    acc_ref[...] += jnp.dot(x_ref[...].astype(jnp.bfloat16), wv_ref[...],
                            preferred_element_type=jnp.float32)

    @pl.when(k == pl.num_programs(1) - 1)
    def _finalize():
        feat = acc_ref[...] + bv_ref[...]                    # bias once per tile
        emb = jnp.dot(feat.astype(wf_ref.dtype), wf_ref[...],
                      preferred_element_type=jnp.float32) + bf_ref[...]
        o_ref[...] = emb.astype(o_ref.dtype)


# ----------------------------------------------------------------------------
# Wrapper: pads / casts operands, builds the grid and calls the kernel.
# x: (M, d_in) f32, where M = 3 * batch (anchor|positive|negative stacked).
# ----------------------------------------------------------------------------
def _fused_encode_fc(x, w_vis, b_vis, w_fc, b_fc, *, tk_target=2048, tm_max=256):
    m, d_in = x.shape
    vis = w_vis.shape[1]
    emb = w_fc.shape[1]

    # --- M tiling: minimize batch padding, round to a multiple of 16.
    n_m = -(-m // tm_max)                              # ceil(M / tm_max)
    tm = min(tm_max, _round_up(-(-m // n_m), 16))
    mp = _round_up(m, tm)

    # --- K tiling: as large as useful (fewer grid steps, bigger DMAs);
    #     clamp to the 128-aligned feature size for small inputs.
    dp0 = _round_up(d_in, 128)
    tk = min(tk_target, dp0)
    dp = _round_up(d_in, tk)

    visp = _round_up(vis, 128)
    embp = _round_up(emb, 128)

    f32, bf16 = jnp.float32, jnp.bfloat16

    def pad2(a, rows, cols, dtype):
        a = a.astype(dtype)
        return jnp.pad(a, ((0, rows - a.shape[0]), (0, cols - a.shape[1])))

    # Activations stay f32 (cast in-kernel); weights pre-cast to bf16.
    x_p = pad2(x, mp, dp, f32)
    wv_p = pad2(w_vis, dp, visp, bf16)
    bv_p = pad2(b_vis, 1, visp, f32)
    wf_p = pad2(w_fc, visp, embp, bf16)
    bf_p = pad2(b_fc, 1, embp, f32)

    grid = (mp // tm, dp // tk)

    x_spec = pl.BlockSpec((tm, tk), lambda i, k: (i, k))
    wv_spec = pl.BlockSpec((tk, visp), lambda i, k: (k, 0))
    bv_spec = pl.BlockSpec((1, visp), lambda i, k: (0, 0))
    wf_spec = pl.BlockSpec((visp, embp), lambda i, k: (0, 0))
    bf_spec = pl.BlockSpec((1, embp), lambda i, k: (0, 0))
    o_spec = pl.BlockSpec((tm, embp), lambda i, k: (i, 0))

    # VMEM plan (double-buffered streamed operands), capped at 48 MiB so the
    # pipeline fits v7x's 64 MiB physical VMEM (v5e/v6e could raise the cap).
    est = (2 * tm * tk * 4                                   # f32 x tiles
           + 2 * tk * visp * 2                               # bf16 w_vis K-tile
           + 2 * (visp * embp * 2 + visp * 4 + embp * 4)     # fc weight+biases
           + 2 * tm * embp * 4                               # output tile
           + tm * visp * 4)                                  # f32 accumulator
    vmem_limit = int(min(48 << 20, max(24 << 20, 2 * est)))

    flops = 2 * mp * dp * visp + 2 * mp * visp * embp
    bytes_accessed = (mp * dp * 4                            # images (f32)
                      + (mp // tm) * dp * visp * 2           # w_vis per M tile
                      + visp * embp * 2 + (visp + embp) * 4  # fc weight+biases
                      + mp * embp * 4)                       # outputs

    out = pl.pallas_call(
        _triplet_kernel,
        out_shape=jax.ShapeDtypeStruct((mp, embp), f32),
        grid_spec=pltpu.PrefetchScalarGridSpec(
            num_scalar_prefetch=0,
            grid=grid,
            in_specs=[x_spec, wv_spec, bv_spec, wf_spec, bf_spec],
            out_specs=o_spec,
            scratch_shapes=[pltpu.VMEM((tm, visp), f32)],
        ),
        compiler_params=pltpu.CompilerParams(
            dimension_semantics=("parallel", "arbitrary"),
            vmem_limit_bytes=vmem_limit,
        ),
        cost_estimate=pl.CostEstimate(
            flops=flops, transcendentals=0, bytes_accessed=bytes_accessed),
    )(x_p, wv_p, bv_p, wf_p, bf_p)

    return out[:m, :emb]


# ----------------------------------------------------------------------------
# Wrapper reproducing TripletNetwork.forward(anchor, positive, negative).
# ----------------------------------------------------------------------------
def triplet_forward(anchor, positive, negative, params):
    """anchor/positive/negative: (B, C, H, W). Returns 3 x (B, EMB_DIM) f32."""
    b = anchor.shape[0]
    flat = lambda t: t.reshape(t.shape[0], -1)       # NCHW -> (B, C*H*W)
    # Stack the triplet along the batch axis: one fused kernel call, the
    # "parallel" M axis has >= 2 tiles for realistic batches (megacore).
    x = jnp.concatenate([flat(anchor), flat(positive), flat(negative)], axis=0)
    emb = _fused_encode_fc(x, params["w_vis"], params["b_vis"],
                           params["w_fc"], params["b_fc"])
    return emb[:b], emb[b:2 * b], emb[2 * b:3 * b]


def init_params(key, in_dim, vis_dim, emb_dim):
    k1, k2, k3, k4 = jax.random.split(key, 4)
    # Deterministic synthetic weights (this is not a checkpoint load).
    w_vis = jax.random.normal(k1, (in_dim, vis_dim), jnp.float32) * 0.02
    b_vis = jax.random.normal(k2, (1, vis_dim), jnp.float32) * 0.01
    # nn.Linear(vis_dim, emb_dim): torch weight is (emb, vis); stored transposed.
    w_fc = jax.random.normal(k3, (vis_dim, emb_dim), jnp.float32) * 0.02
    b_fc = jax.random.normal(k4, (1, emb_dim), jnp.float32) * 0.01
    return {"w_vis": w_vis, "b_vis": b_vis, "w_fc": w_fc, "b_fc": b_fc}


if __name__ == "__main__":
    B, C, H, W = 2, 3, 16, 16          # small image batch (NCHW)
    VIS_DIM = 64                        # clip_model.visual.output_dim (synthetic)
    EMB_DIM = 128                       # embedding_dim of TripletNetwork.fc

    key = jax.random.PRNGKey(0)
    k_a, k_p, k_n, k_w = jax.random.split(key, 4)
    anchor = jax.random.normal(k_a, (B, C, H, W), jnp.float32)
    positive = jax.random.normal(k_p, (B, C, H, W), jnp.float32)
    negative = jax.random.normal(k_n, (B, C, H, W), jnp.float32)

    params = init_params(k_w, C * H * W, VIS_DIM, EMB_DIM)

    out1, out2, out3 = triplet_forward(anchor, positive, negative, params)
    jax.block_until_ready((out1, out2, out3))

    # Reference in plain JAX mirroring the kernel's bf16-input / f32-accumulate
    # precision path.
    def ref_once(x):
        xf = x.reshape(x.shape[0], -1).astype(jnp.bfloat16).astype(jnp.float32)
        wv = params["w_vis"].astype(jnp.bfloat16).astype(jnp.float32)
        feat = xf @ wv + params["b_vis"]
        featb = feat.astype(jnp.bfloat16).astype(jnp.float32)
        wf = params["w_fc"].astype(jnp.bfloat16).astype(jnp.float32)
        return featb @ wf + params["b_fc"]

    r1, r2, r3 = ref_once(anchor), ref_once(positive), ref_once(negative)
    assert out1.shape == (B, EMB_DIM)
    assert out2.shape == (B, EMB_DIM)
    assert out3.shape == (B, EMB_DIM)
    assert jnp.allclose(out1, r1, atol=5e-3, rtol=5e-3)
    assert jnp.allclose(out2, r2, atol=5e-3, rtol=5e-3)
    assert jnp.allclose(out3, r3, atol=5e-3, rtol=5e-3)

    print("KERNEL_OK")
</pallas_src>

<mosaic_0001>
module attributes {stable_mosaic.version = 11 : i64} {
  func.func @_triplet_kernel(%arg0: i32, %arg1: i32, %arg2: memref<16x768xf32, #tpu.memory_space<vmem>>, %arg3: memref<768x128xbf16, #tpu.memory_space<vmem>>, %arg4: memref<1x128xf32, #tpu.memory_space<vmem>>, %arg5: memref<128x128xbf16, #tpu.memory_space<vmem>>, %arg6: memref<1x128xf32, #tpu.memory_space<vmem>>, %arg7: memref<16x128xf32, #tpu.memory_space<vmem>>, %arg8: memref<16x128xf32, #tpu.memory_space<vmem>>) attributes {dimension_semantics = [#tpu.dimension_semantics<parallel>, #tpu.dimension_semantics<arbitrary>], iteration_bounds = array<i64: 1, 1>, scalar_prefetch = 0 : i64, scratch_operands = 1 : i64, tpu.core_type = #tpu.core_type<tc>, window_params = [{transform_indices = @transform_0, window_bounds = array<i64: 16, 768>}, {transform_indices = @transform_1, window_bounds = array<i64: 768, 128>}, {pipeline_mode = #tpu.pipeline_mode<synchronous>, transform_indices = @transform_2, window_bounds = array<i64: 1, 128>}, {pipeline_mode = #tpu.pipeline_mode<synchronous>, transform_indices = @transform_3, window_bounds = array<i64: 128, 128>}, {pipeline_mode = #tpu.pipeline_mode<synchronous>, transform_indices = @transform_4, window_bounds = array<i64: 1, 128>}, {transform_indices = @transform_5, window_bounds = array<i64: 16, 128>}]} {
    %c0_i32 = arith.constant 0 : i32
    %0 = arith.cmpi eq, %arg1, %c0_i32 : i32
    %1 = arith.extui %0 : i1 to i32
    %c0_i32_0 = arith.constant 0 : i32
    %2 = arith.cmpi ne, %1, %c0_i32_0 : i32
    scf.if %2 {
      %cst_10 = arith.constant 0.000000e+00 : f32
      %13 = vector.broadcast %cst_10 : f32 to vector<16x128xf32>
      %c0_11 = arith.constant 0 : index
      %c0_12 = arith.constant 0 : index
      %14 = vector.load %arg8[%c0_11, %c0_12] : memref<16x128xf32, #tpu.memory_space<vmem>>, vector<16x128xf32>
      tpu.vector_store %arg8[%c0_11, %c0_12], %13 {strides = array<i32>} : memref<16x128xf32, #tpu.memory_space<vmem>>, vector<16x128xf32>,
    } else {
    }
    %c0 = arith.constant 0 : index
    %c0_1 = arith.constant 0 : index
    %3 = vector.load %arg8[%c0, %c0_1] : memref<16x128xf32, #tpu.memory_space<vmem>>, vector<16x128xf32>
    %c0_2 = arith.constant 0 : index
    %c0_3 = arith.constant 0 : index
    %4 = vector.load %arg2[%c0_2, %c0_3] : memref<16x768xf32, #tpu.memory_space<vmem>>, vector<16x768xf32>
    %5 = arith.truncf %4 : vector<16x768xf32> to vector<16x768xbf16>
    %c0_4 = arith.constant 0 : index
    %c0_5 = arith.constant 0 : index
    %6 = vector.load %arg3[%c0_4, %c0_5] : memref<768x128xbf16, #tpu.memory_space<vmem>>, vector<768x128xbf16>
    %cst = arith.constant dense<0.000000e+00> : vector<16x128xf32>
    %7 = tpu.matmul %5, %6, %cst {dimension_numbers = #tpu.dot_dimension_numbers<[1], [0], [0], [1], [0, 0, 1, 1], [], []>} : vector<16x768xbf16>, vector<768x128xbf16>, vector<16x128xf32> -> vector<16x128xf32>
    %8 = arith.addf %3, %7 : vector<16x128xf32>
    %c0_6 = arith.constant 0 : index
    %c0_7 = arith.constant 0 : index
    %9 = vector.load %arg8[%c0_6, %c0_7] : memref<16x128xf32, #tpu.memory_space<vmem>>, vector<16x128xf32>
    tpu.vector_store %arg8[%c0_6, %c0_7], %8 {strides = array<i32>} : memref<16x128xf32, #tpu.memory_space<vmem>>, vector<16x128xf32>,
    %c0_i32_8 = arith.constant 0 : i32
    %10 = arith.cmpi eq, %arg1, %c0_i32_8 : i32
    %11 = arith.extui %10 : i1 to i32
    %c0_i32_9 = arith.constant 0 : i32
    %12 = arith.cmpi ne, %11, %c0_i32_9 : i32
    scf.if %12 {
      %c0_10 = arith.constant 0 : index
      %c0_11 = arith.constant 0 : index
      %13 = vector.load %arg8[%c0_10, %c0_11] : memref<16x128xf32, #tpu.memory_space<vmem>>, vector<16x128xf32>
      %c0_12 = arith.constant 0 : index
      %c0_13 = arith.constant 0 : index
      %14 = vector.load %arg4[%c0_12, %c0_13] : memref<1x128xf32, #tpu.memory_space<vmem>>, vector<1x128xf32>
      %15 = vector.broadcast %14 : vector<1x128xf32> to vector<16x128xf32>
      %16 = arith.addf %13, %15 : vector<16x128xf32>
      %17 = arith.truncf %16 : vector<16x128xf32> to vector<16x128xbf16>
      %c0_14 = arith.constant 0 : index
      %c0_15 = arith.constant 0 : index
      %18 = vector.load %arg5[%c0_14, %c0_15] : memref<128x128xbf16, #tpu.memory_space<vmem>>, vector<128x128xbf16>
      %cst_16 = arith.constant dense<0.000000e+00> : vector<16x128xf32>
      %19 = tpu.matmul %17, %18, %cst_16 {dimension_numbers = #tpu.dot_dimension_numbers<[1], [0], [0], [1], [0, 0, 1, 1], [], []>} : vector<16x128xbf16>, vector<128x128xbf16>, vector<16x128xf32> -> vector<16x128xf32>
      %c0_17 = arith.constant 0 : index
      %c0_18 = arith.constant 0 : index
      %20 = vector.load %arg6[%c0_17, %c0_18] : memref<1x128xf32, #tpu.memory_space<vmem>>, vector<1x128xf32>
      %21 = vector.broadcast %20 : vector<1x128xf32> to vector<16x128xf32>
      %22 = arith.addf %19, %21 : vector<16x128xf32>
      %c0_19 = arith.constant 0 : index
      %c0_20 = arith.constant 0 : index
      %23 = vector.load %arg7[%c0_19, %c0_20] : memref<16x128xf32, #tpu.memory_space<vmem>>, vector<16x128xf32>
      tpu.vector_store %arg7[%c0_19, %c0_20], %22 {strides = array<i32>} : memref<16x128xf32, #tpu.memory_space<vmem>>, vector<16x128xf32>,
    } else {
    }
    return
  }
  func.func @transform_0(%arg0: i32, %arg1: i32) -> (i32, i32) {
    %c0_i32 = arith.constant 0 : i32
    return %arg0, %arg1 : i32, i32
  }
  func.func @transform_1(%arg0: i32, %arg1: i32) -> (i32, i32) {
    %c0_i32 = arith.constant 0 : i32
    %c0_i32_0 = arith.constant 0 : i32
    return %arg1, %c0_i32 : i32, i32
  }
  func.func @transform_2(%arg0: i32, %arg1: i32) -> (i32, i32) {
    %c0_i32 = arith.constant 0 : i32
    %c0_i32_0 = arith.constant 0 : i32
    %c0_i32_1 = arith.constant 0 : i32
    return %c0_i32, %c0_i32_0 : i32, i32
  }
  func.func @transform_3(%arg0: i32, %arg1: i32) -> (i32, i32) {
    %c0_i32 = arith.constant 0 : i32
    %c0_i32_0 = arith.constant 0 : i32
    %c0_i32_1 = arith.constant 0 : i32
    return %c0_i32, %c0_i32_0 : i32, i32
  }
  func.func @transform_4(%arg0: i32, %arg1: i32) -> (i32, i32) {
    %c0_i32 = arith.constant 0 : i32
    %c0_i32_0 = arith.constant 0 : i32
    %c0_i32_1 = arith.constant 0 : i32
    return %c0_i32, %c0_i32_0 : i32, i32
  }
  func.func @transform_5(%arg0: i32, %arg1: i32) -> (i32, i32) {
    %c0_i32 = arith.constant 0 : i32
    %c0_i32_0 = arith.constant 0 : i32
    return %arg0, %c0_i32 : i32, i32
  }
}

</mosaic_0001>

<llo_original>
// kernel: tpu_custom_call.1
$region0: #{tpu_custom_call.1}
  #allocation0 [shape = 'u32[]', space=smem, size = 0x4, offset = 0x4, fixed_abs, tag = 'smem constant byte address 0x4 - core index']
  #allocation1 [shape = 'u32[72,128]{1,0:T(1,128)}', space=vmem, size = 0x9000, scoped, tag = 'internal scratch']
  #allocation2 [shape = 'f32[16,128]{1,0:T(8,128)}', space=vmem, size = 0x2000, scoped, tag = 'scratch operand']
  %s0 = inlined_call_operand.hbm [shape: f32[16,768], index: 0, kind: input, shape index: {}]
  %s1 = inlined_call_operand.hbm [shape: bf16[768,128], index: 1, kind: input, shape index: {}]
  %s2 = inlined_call_operand.vmem [shape: f32[1,128], index: 2, kind: input, shape index: {}]
  %s3 = inlined_call_operand.hbm [shape: bf16[128,128], index: 3, kind: input, shape index: {}]
  %s4 = inlined_call_operand.vmem [shape: f32[1,128], index: 4, kind: input, shape index: {}]
  %s5 = inlined_call_operand.hbm [shape: f32[16,128], index: 5, kind: output, shape index: {}]
  %s6 = sld [smem:[#allocation0]]
  $region50: #{tpu_custom_call.1} parent=0
    _
  %s8 = ssub.s32 1, %s6
  %s9 = scalar_select 0, %s8, %s6
  $region1: #{tpu_custom_call.1} parent=0
    #allocation3 [shape = 'u8[49152]{0}', space=vmem, size = 0xc000, scoped, tag = 'input window, operand 0, single buffered']
    #allocation4 [shape = 's32[1]{0}', space=sflag, size = 0x4, scoped, tag = 'scoped memory for tpu_custom_call.1']
    #allocation5 [shape = 's32[1]{0}', space=sflag, size = 0x4, scoped, tag = 'scoped memory for tpu_custom_call.1']
    #allocation6 [shape = 'u8[196608]{0}', space=vmem, size = 0x30000, scoped, tag = 'input window, operand 1, single buffered']
    #allocation7 [shape = 's32[1]{0}', space=sflag, size = 0x4, scoped, tag = 'scoped memory for tpu_custom_call.1']
    #allocation8 [shape = 'u8[32768]{0}', space=vmem, size = 0x8000, scoped, tag = 'input window, operand 3, single buffered']
    #allocation9 [shape = 'u8[8192]{0}', space=vmem, size = 0x2000, scoped, tag = 'output window, operand 0, single buffered']
    %10 = vsyncpa [#allocation4], 0
    %11 = vsyncpa [#allocation7], 0
    %12 = vsyncpa [#allocation5], 0
    // Predicated region
    $region2: #{tpu_custom_call.1} parent=1 // pred_check
      _
    $region3: #{tpu_custom_call.1} parent=1 // pred_check_branch
      %14 = sbr.rel (0) target = $region5
    $region4: #{tpu_custom_call.1} parent=1 // pred_region
      %16 = vsyncadd [#allocation4], 0
      %s17 = sshll.u32 %s0, 4
      %s18 = int_to_ptr.hbm [resolvable:$true] %s17
      %s19 = sshll.u32 [#allocation3], 4
      %s20 = int_to_ptr.vmem [resolvable:$true] %s19
      %25 = dma.hbm_to_vmem [thread:$0]  %s18, 1536, %s20, [#allocation4], 768, 768, 48
    $region5: #{tpu_custom_call.1} parent=1 // pred_fallthru
      _
    // Predicated region
    $region6: #{tpu_custom_call.1} parent=1 // pred_check
      _
    $region7: #{tpu_custom_call.1} parent=1 // pred_check_branch
      %27 = sbr.rel (0) target = $region9
    $region8: #{tpu_custom_call.1} parent=1 // pred_region
      %29 = vsyncadd [#allocation7], 0
      %s30 = sshll.u32 %s1, 4
      %s31 = int_to_ptr.hbm [resolvable:$true] %s30
      %s32 = sshll.u32 [#allocation6], 4
      %s33 = int_to_ptr.vmem [resolvable:$true] %s32
      %38 = dma.hbm_to_vmem [thread:$0]  %s31, 6144, %s33, [#allocation7], 64, 64, 4
    $region9: #{tpu_custom_call.1} parent=1 // pred_fallthru
      _
    // Predicated region
    $region10: #{tpu_custom_call.1} parent=1 // pred_check
      _
    $region11: #{tpu_custom_call.1} parent=1 // pred_check_branch
      %40 = sbr.rel (0) target = $region13
    $region12: #{tpu_custom_call.1} parent=1 // pred_region
      _
    $region13: #{tpu_custom_call.1} parent=1 // pred_fallthru
      _
    // Predicated region
    $region14: #{tpu_custom_call.1} parent=1 // pred_check
      _
    $region15: #{tpu_custom_call.1} parent=1 // pred_check_branch
      %42 = sbr.rel (0) target = $region17
    $region16: #{tpu_custom_call.1} parent=1 // pred_region
      %44 = vsyncadd [#allocation7], 0
      %s45 = sshll.u32 %s3, 4
      %s46 = int_to_ptr.hbm [resolvable:$true] %s45
      %s47 = sshll.u32 [#allocation8], 4
      %s48 = int_to_ptr.vmem [resolvable:$true] %s47
      %53 = dma.hbm_to_vmem [thread:$0]  %s46, 1024, %s48, [#allocation7], 64, 64, 4
    $region17: #{tpu_custom_call.1} parent=1 // pred_fallthru
      _
    // Predicated region
    $region18: #{tpu_custom_call.1} parent=1 // pred_check
      _
    $region19: #{tpu_custom_call.1} parent=1 // pred_check_branch
      %55 = sbr.rel (0) target = $region21
    $region20: #{tpu_custom_call.1} parent=1 // pred_region
      _
    $region21: #{tpu_custom_call.1} parent=1 // pred_fallthru
      _
    // Predicated region
    $region22: #{tpu_custom_call.1} parent=1 // pred_check
      _
    $region23: #{tpu_custom_call.1} parent=1 // pred_check_branch
      %57 = sbr.rel (0) target = $region25
    $region24: #{tpu_custom_call.1} parent=1 // pred_region
      %59 = dma.done [#allocation4], 1536
    $region25: #{tpu_custom_call.1} parent=1 // pred_fallthru
      _
    // Predicated region
    $region26: #{tpu_custom_call.1} parent=1 // pred_check
      _
    $region27: #{tpu_custom_call.1} parent=1 // pred_check_branch
      %61 = sbr.rel (0) target = $region29
    $region28: #{tpu_custom_call.1} parent=1 // pred_region
      %63 = dma.done [#allocation7], 6144
    $region29: #{tpu_custom_call.1} parent=1 // pred_fallthru
      _
    // Predicated region
    $region30: #{tpu_custom_call.1} parent=1 // pred_check
      _
    $region31: #{tpu_custom_call.1} parent=1 // pred_check_branch
      %65 = sbr.rel (0) target = $region33
    $region32: #{tpu_custom_call.1} parent=1 // pred_region
      %67 = dma.done [#allocation7], 1024
    $region33: #{tpu_custom_call.1} parent=1 // pred_fallthru
      _
    %p68 = scmp.eq.s32.totalorder 0, 0
    // Predicated region
    $region34: #{tpu_custom_call.1} parent=1 // pred_check
      %p69 = pneg %p68
    $region35: #{tpu_custom_call.1} parent=1 // pred_check_branch
      %71 = sbr.rel (%p69) target = $region37
    $region36: #{tpu_custom_call.1} parent=1 // pred_region
      %72 = vst [vmem:[#allocation2] sm:$0xff] 0.0
      %73 = vst [vmem:[#allocation2 + $0x8] sm:$0xff] 0.0
    $region37: #{tpu_custom_call.1} parent=1 // pred_fallthru
      _
    %v74 = vld [vmem:[#allocation2] sm:$0xff]
    %v75 = vld [vmem:[#allocation2 + $0x8] sm:$0xff]
    %v76 = vld [vmem:[#allocation3] sm:$0xff]
    %v77 = vld [vmem:[#allocation3 + $0x8] sm:$0xff]
    %v78 = vld [vmem:[#allocation3 + $0x10] sm:$0xff]
    %v79 = vld [vmem:[#allocation3 + $0x18] sm:$0xff]
    %v80 = vld [vmem:[#allocation3 + $0x20] sm:$0xff]
    %v81 = vld [vmem:[#allocation3 + $0x28] sm:$0xff]
    %v82 = vld [vmem:[#allocation3 + $0x30] sm:$0xff]
    %v83 = vld [vmem:[#allocation3 + $0x38] sm:$0xff]
    %v84 = vld [vmem:[#allocation3 + $0x40] sm:$0xff]
    %v85 = vld [vmem:[#allocation3 + $0x48] sm:$0xff]
    %v86 = vld [vmem:[#allocation3 + $0x50] sm:$0xff]
    %v87 = vld [vmem:[#allocation3 + $0x58] sm:$0xff]
    %v88 = vpack.c.bf16 %v82, %v76
    %v89 = vpack.c.bf16 %v83, %v77
    %v90 = vpack.c.bf16 %v84, %v78
    %v91 = vpack.c.bf16 %v85, %v79
    %v92 = vpack.c.bf16 %v86, %v80
    %v93 = vpack.c.bf16 %v87, %v81
    %v94 = vld [vmem:[#allocation6] sm:$0xf]
    %v95 = vld [vmem:[#allocation6 + $0x4] sm:$0xf]
    %v96 = vld [vmem:[#allocation6 + $0x8] sm:$0xf]
    %v97 = vld [vmem:[#allocation6 + $0xc] sm:$0xf]
    %v98 = vld [vmem:[#allocation6 + $0x10] sm:$0xf]
    %v99 = vld [vmem:[#allocation6 + $0x14] sm:$0xf]
    %v100 = vld [vmem:[#allocation6 + $0x18] sm:$0xf]
    %v101 = vld [vmem:[#allocation6 + $0x1c] sm:$0xf]
    %v102 = vld [vmem:[#allocation6 + $0x20] sm:$0xf]
    %v103 = vld [vmem:[#allocation6 + $0x24] sm:$0xf]
    %v104 = vld [vmem:[#allocation6 + $0x28] sm:$0xf]
    %v105 = vld [vmem:[#allocation6 + $0x2c] sm:$0xf]
    %v106 = vld [vmem:[#allocation6 + $0x30] sm:$0xf]
    %v107 = vld [vmem:[#allocation6 + $0x34] sm:$0xf]
    %v108 = vld [vmem:[#allocation6 + $0x38] sm:$0xf]
    %v109 = vld [vmem:[#allocation6 + $0x3c] sm:$0xf]
    %v110 = vld [vmem:[#allocation6 + $0x40] sm:$0xf]
    %v111 = vld [vmem:[#allocation6 + $0x44] sm:$0xf]
    %v112 = vld [vmem:[#allocation6 + $0x48] sm:$0xf]
    %v113 = vld [vmem:[#allocation6 + $0x4c] sm:$0xf]
    %v114 = vld [vmem:[#allocation6 + $0x50] sm:$0xf]
    %v115 = vld [vmem:[#allocation6 + $0x54] sm:$0xf]
    %v116 = vld [vmem:[#allocation6 + $0x58] sm:$0xf]
    %v117 = vld [vmem:[#allocation6 + $0x5c] sm:$0xf]
    %v118 = vld [vmem:[#allocation6 + $0x60] sm:$0xf]
    %v119 = vld [vmem:[#allocation6 + $0x64] sm:$0xf]
    %v120 = vld [vmem:[#allocation6 + $0x68] sm:$0xf]
    %v121 = vld [vmem:[#allocation6 + $0x6c] sm:$0xf]
    %v122 = vld [vmem:[#allocation6 + $0x70] sm:$0xf]
    %v123 = vld [vmem:[#allocation6 + $0x74] sm:$0xf]
    %v124 = vld [vmem:[#allocation6 + $0x78] sm:$0xf]
    %v125 = vld [vmem:[#allocation6 + $0x7c] sm:$0xf]
    %v126 = vld [vmem:[#allocation6 + $0x80] sm:$0xf]
    %v127 = vld [vmem:[#allocation6 + $0x84] sm:$0xf]
    %v128 = vld [vmem:[#allocation6 + $0x88] sm:$0xf]
    %v129 = vld [vmem:[#allocation6 + $0x8c] sm:$0xf]
    %v130 = vld [vmem:[#allocation6 + $0x90] sm:$0xf]
    %v131 = vld [vmem:[#allocation6 + $0x94] sm:$0xf]
    %v132 = vld [vmem:[#allocation6 + $0x98] sm:$0xf]
    %v133 = vld [vmem:[#allocation6 + $0x9c] sm:$0xf]
    %v134 = vld [vmem:[#allocation6 + $0xa0] sm:$0xf]
    %v135 = vld [vmem:[#allocation6 + $0xa4] sm:$0xf]
    %v136 = vld [vmem:[#allocation6 + $0xa8] sm:$0xf]
    %v137 = vld [vmem:[#allocation6 + $0xac] sm:$0xf]
    %v138 = vld [vmem:[#allocation6 + $0xb0] sm:$0xf]
    %v139 = vld [vmem:[#allocation6 + $0xb4] sm:$0xf]
    %v140 = vld [vmem:[#allocation6 + $0xb8] sm:$0xf]
    %v141 = vld [vmem:[#allocation6 + $0xbc] sm:$0xf]
    %v142 = vld [vmem:[#allocation6 + $0xc0] sm:$0xf]
    %v143 = vld [vmem:[#allocation6 + $0xc4] sm:$0xf]
    %v144 = vld [vmem:[#allocation6 + $0xc8] sm:$0xf]
    %v145 = vld [vmem:[#allocation6 + $0xcc] sm:$0xf]
    %v146 = vld [vmem:[#allocation6 + $0xd0] sm:$0xf]
    %v147 = vld [vmem:[#allocation6 + $0xd4] sm:$0xf]
    %v148 = vld [vmem:[#allocation6 + $0xd8] sm:$0xf]
    %v149 = vld [vmem:[#allocation6 + $0xdc] sm:$0xf]
    %v150 = vld [vmem:[#allocation6 + $0xe0] sm:$0xf]
    %v151 = vld [vmem:[#allocation6 + $0xe4] sm:$0xf]
    %v152 = vld [vmem:[#allocation6 + $0xe8] sm:$0xf]
    %v153 = vld [vmem:[#allocation6 + $0xec] sm:$0xf]
    %v154 = vld [vmem:[#allocation6 + $0xf0] sm:$0xf]
    %v155 = vld [vmem:[#allocation6 + $0xf4] sm:$0xf]
    %v156 = vld [vmem:[#allocation6 + $0xf8] sm:$0xf]
    %v157 = vld [vmem:[#allocation6 + $0xfc] sm:$0xf]
    %v158 = vld [vmem:[#allocation6 + $0x100] sm:$0xf]
    %v159 = vld [vmem:[#allocation6 + $0x104] sm:$0xf]
    %v160 = vld [vmem:[#allocation6 + $0x108] sm:$0xf]
    %v161 = vld [vmem:[#allocation6 + $0x10c] sm:$0xf]
    %v162 = vld [vmem:[#allocation6 + $0x110] sm:$0xf]
    %v163 = vld [vmem:[#allocation6 + $0x114] sm:$0xf]
    %v164 = vld [vmem:[#allocation6 + $0x118] sm:$0xf]
    %v165 = vld [vmem:[#allocation6 + $0x11c] sm:$0xf]
    %v166 = vld [vmem:[#allocation6 + $0x120] sm:$0xf]
    %v167 = vld [vmem:[#allocation6 + $0x124] sm:$0xf]
    %v168 = vld [vmem:[#allocation6 + $0x128] sm:$0xf]
    %v169 = vld [vmem:[#allocation6 + $0x12c] sm:$0xf]
    %v170 = vld [vmem:[#allocation6 + $0x130] sm:$0xf]
    %v171 = vld [vmem:[#allocation6 + $0x134] sm:$0xf]
    %v172 = vld [vmem:[#allocation6 + $0x138] sm:$0xf]
    %v173 = vld [vmem:[#allocation6 + $0x13c] sm:$0xf]
    %v174 = vld [vmem:[#allocation6 + $0x140] sm:$0xf]
    %v175 = vld [vmem:[#allocation6 + $0x144] sm:$0xf]
    %v176 = vld [vmem:[#allocation6 + $0x148] sm:$0xf]
    %v177 = vld [vmem:[#allocation6 + $0x14c] sm:$0xf]
    %v178 = vld [vmem:[#allocation6 + $0x150] sm:$0xf]
    %v179 = vld [vmem:[#allocation6 + $0x154] sm:$0xf]
    %v180 = vld [vmem:[#allocation6 + $0x158] sm:$0xf]
    %v181 = vld [vmem:[#allocation6 + $0x15c] sm:$0xf]
    %v182 = vld [vmem:[#allocation6 + $0x160] sm:$0xf]
    %v183 = vld [vmem:[#allocation6 + $0x164] sm:$0xf]
    %v184 = vld [vmem:[#allocation6 + $0x168] sm:$0xf]
    %v185 = vld [vmem:[#allocation6 + $0x16c] sm:$0xf]
    %v186 = vld [vmem:[#allocation6 + $0x170] sm:$0xf]
    %v187 = vld [vmem:[#allocation6 + $0x174] sm:$0xf]
    %v188 = vld [vmem:[#allocation6 + $0x178] sm:$0xf]
    %v189 = vld [vmem:[#allocation6 + $0x17c] sm:$0xf]
    %v286 = vunpack.c.l.b16 %v94
    %v287 = vunpack.c.l.b16 %v95
    %v288 = vunpack.c.l.b16 %v96
    %v289 = vunpack.c.l.b16 %v97
    %v290 = vunpack.c.l.b16 %v98
    %v291 = vunpack.c.l.b16 %v99
    %v292 = vunpack.c.l.b16 %v100
    %v293 = vunpack.c.l.b16 %v101
    %v294 = vunpack.c.l.b16 %v102
    %v295 = vunpack.c.l.b16 %v103
    %v296 = vunpack.c.l.b16 %v104
    %v297 = vunpack.c.l.b16 %v105
    %v298 = vunpack.c.l.b16 %v106
    %v299 = vunpack.c.l.b16 %v107
    %v300 = vunpack.c.l.b16 %v108
    %v301 = vunpack.c.l.b16 %v109
    %v302 = vunpack.c.l.b16 %v110
    %v303 = vunpack.c.l.b16 %v111
    %v304 = vunpack.c.l.b16 %v112
    %v305 = vunpack.c.l.b16 %v113
    %v306 = vunpack.c.l.b16 %v114
    %v307 = vunpack.c.l.b16 %v115
    %v308 = vunpack.c.l.b16 %v116
    %v309 = vunpack.c.l.b16 %v117
    %v310 = vunpack.c.l.b16 %v118
    %v311 = vunpack.c.l.b16 %v119
    %v312 = vunpack.c.l.b16 %v120
    %v313 = vunpack.c.l.b16 %v121
    %v314 = vunpack.c.l.b16 %v122
    %v315 = vunpack.c.l.b16 %v123
    %v316 = vunpack.c.l.b16 %v124
    %v317 = vunpack.c.l.b16 %v125
    %v318 = vunpack.c.l.b16 %v126
    %v319 = vunpack.c.l.b16 %v127
    %v320 = vunpack.c.l.b16 %v128
    %v321 = vunpack.c.l.b16 %v129
    %v322 = vunpack.c.l.b16 %v130
    %v323 = vunpack.c.l.b16 %v131
    %v324 = vunpack.c.l.b16 %v132
    %v325 = vunpack.c.l.b16 %v133
    %v326 = vunpack.c.l.b16 %v134
    %v327 = vunpack.c.l.b16 %v135
    %v328 = vunpack.c.l.b16 %v136
    %v329 = vunpack.c.l.b16 %v137
    %v330 = vunpack.c.l.b16 %v138
    %v331 = vunpack.c.l.b16 %v139
    %v332 = vunpack.c.l.b16 %v140
    %v333 = vunpack.c.l.b16 %v141
    %v334 = vunpack.c.l.b16 %v142
    %v335 = vunpack.c.l.b16 %v143
    %v336 = vunpack.c.l.b16 %v144
    %v337 = vunpack.c.l.b16 %v145
    %v338 = vunpack.c.l.b16 %v146
    %v339 = vunpack.c.l.b16 %v147
    %v340 = vunpack.c.l.b16 %v148
    %v341 = vunpack.c.l.b16 %v149
    %v342 = vunpack.c.l.b16 %v150
    %v343 = vunpack.c.l.b16 %v151
    %v344 = vunpack.c.l.b16 %v152
    %v345 = vunpack.c.l.b16 %v153
    %v346 = vunpack.c.l.b16 %v154
    %v347 = vunpack.c.l.b16 %v155
    %v348 = vunpack.c.l.b16 %v156
    %v349 = vunpack.c.l.b16 %v157
    %v350 = vunpack.c.l.b16 %v158
    %v351 = vunpack.c.l.b16 %v159
    %v352 = vunpack.c.l.b16 %v160
    %v353 = vunpack.c.l.b16 %v161
    %v354 = vunpack.c.l.b16 %v162
    %v355 = vunpack.c.l.b16 %v163
    %v356 = vunpack.c.l.b16 %v164
    %v357 = vunpack.c.l.b16 %v165
    %v358 = vunpack.c.l.b16 %v166
    %v359 = vunpack.c.l.b16 %v167
    %v360 = vunpack.c.l.b16 %v168
    %v361 = vunpack.c.l.b16 %v169
    %v362 = vunpack.c.l.b16 %v170
    %v363 = vunpack.c.l.b16 %v171
    %v364 = vunpack.c.l.b16 %v172
    %v365 = vunpack.c.l.b16 %v173
    %v366 = vunpack.c.l.b16 %v174
    %v367 = vunpack.c.l.b16 %v175
    %v368 = vunpack.c.l.b16 %v176
    %v369 = vunpack.c.l.b16 %v177
    %v370 = vunpack.c.l.b16 %v178
    %v371 = vunpack.c.l.b16 %v179
    %v372 = vunpack.c.l.b16 %v180
    %v373 = vunpack.c.l.b16 %v181
    %v374 = vunpack.c.l.b16 %v182
    %v375 = vunpack.c.l.b16 %v183
    %v376 = vunpack.c.l.b16 %v184
    %v377 = vunpack.c.l.b16 %v185
    %v378 = vunpack.c.l.b16 %v186
    %v379 = vunpack.c.l.b16 %v187
    %v380 = vunpack.c.l.b16 %v188
    %v381 = vunpack.c.l.b16 %v189
    %v382 = vpack.c.b16 %v287, %v286
    %v383 = vpack.c.b16 %v289, %v288
    %v384 = vpack.c.b16 %v291, %v290
    %v385 = vpack.c.b16 %v293, %v292
    %v386 = vpack.c.b16 %v295, %v294
    %v387 = vpack.c.b16 %v297, %v296
    %v388 = vpack.c.b16 %v299, %v298
    %v389 = vpack.c.b16 %v301, %v300
    %v390 = vpack.c.b16 %v303, %v302
    %v391 = vpack.c.b16 %v305, %v304
    %v392 = vpack.c.b16 %v307, %v306
    %v393 = vpack.c.b16 %v309, %v308
    %v394 = vpack.c.b16 %v311, %v310
    %v395 = vpack.c.b16 %v313, %v312
    %v396 = vpack.c.b16 %v315, %v314
    %v397 = vpack.c.b16 %v317, %v316
    %v398 = vpack.c.b16 %v319, %v318
    %v399 = vpack.c.b16 %v321, %v320
    %v400 = vpack.c.b16 %v323, %v322
    %v401 = vpack.c.b16 %v325, %v324
    %v402 = vpack.c.b16 %v327, %v326
    %v403 = vpack.c.b16 %v329, %v328
    %v404 = vpack.c.b16 %v331, %v330
    %v405 = vpack.c.b16 %v333, %v332
    %v406 = vpack.c.b16 %v335, %v334
    %v407 = vpack.c.b16 %v337, %v336
    %v408 = vpack.c.b16 %v339, %v338
    %v409 = vpack.c.b16 %v341, %v340
    %v410 = vpack.c.b16 %v343, %v342
    %v411 = vpack.c.b16 %v345, %v344
    %v412 = vpack.c.b16 %v347, %v346
    %v413 = vpack.c.b16 %v349, %v348
    %v414 = vpack.c.b16 %v351, %v350
    %v415 = vpack.c.b16 %v353, %v352
    %v416 = vpack.c.b16 %v355, %v354
    %v417 = vpack.c.b16 %v357, %v356
    %v418 = vpack.c.b16 %v359, %v358
    %v419 = vpack.c.b16 %v361, %v360
    %v420 = vpack.c.b16 %v363, %v362
    %v421 = vpack.c.b16 %v365, %v364
    %v422 = vpack.c.b16 %v367, %v366
    %v423 = vpack.c.b16 %v369, %v368
    %v424 = vpack.c.b16 %v371, %v370
    %v425 = vpack.c.b16 %v373, %v372
    %v426 = vpack.c.b16 %v375, %v374
    %v427 = vpack.c.b16 %v377, %v376
    %v428 = vpack.c.b16 %v379, %v378
    %v429 = vpack.c.b16 %v381, %v380
    %478 = vmatpush.bf16.msra.mxu0 %v389
    %479 = vmatpush.bf16.msra.mxu0 %v388
    %480 = vmatpush.bf16.msra.mxu0 %v387
    %481 = vmatpush.bf16.msra.mxu0 %v386
    %482 = vmatpush.bf16.msra.mxu0 %v385
    %483 = vmatpush.bf16.msra.mxu0 %v384
    %484 = vmatpush.bf16.msra.mxu0 %v383
    %485 = vmatpush.bf16.msra.mxu0 %v382
    %486 = vmatmul.bf16.gmra.mxu0 %v88
    %v487 = vpop.f32.mrf.mxu0
    %v488 = vadd.f32 0.0, %v487
    %v489 = vpop.f32.mrf.mxu0
    %v490 = vadd.f32 0.0, %v489
    %491 = vdwg.mxu0
    %492 = vmatpush.bf16.msra.mxu0 %v397
    %493 = vmatpush.bf16.msra.mxu0 %v396
    %494 = vmatpush.bf16.msra.mxu0 %v395
    %495 = vmatpush.bf16.msra.mxu0 %v394
    %496 = vmatpush.bf16.msra.mxu0 %v393
    %497 = vmatpush.bf16.msra.mxu0 %v392
    %498 = vmatpush.bf16.msra.mxu0 %v391
    %499 = vmatpush.bf16.msra.mxu0 %v390
    %500 = vmatmul.bf16.gmra.mxu0 %v89
    %v501 = vpop.f32.mrf.mxu0
    %v502 = vadd.f32 %v488, %v501
    %v503 = vpop.f32.mrf.mxu0
    %v504 = vadd.f32 %v490, %v503
    %505 = vdwg.mxu0
    %506 = vmatpush.bf16.msra.mxu0 %v405
    %507 = vmatpush.bf16.msra.mxu0 %v404
    %508 = vmatpush.bf16.msra.mxu0 %v403
    %509 = vmatpush.bf16.msra.mxu0 %v402
    %510 = vmatpush.bf16.msra.mxu0 %v401
    %511 = vmatpush.bf16.msra.mxu0 %v400
    %512 = vmatpush.bf16.msra.mxu0 %v399
    %513 = vmatpush.bf16.msra.mxu0 %v398
    %514 = vmatmul.bf16.gmra.mxu0 %v90
    %v515 = vpop.f32.mrf.mxu0
    %v516 = vadd.f32 %v502, %v515
    %v517 = vpop.f32.mrf.mxu0
    %v518 = vadd.f32 %v504, %v517
    %519 = vdwg.mxu0
    %520 = vmatpush.bf16.msra.mxu0 %v413
    %521 = vmatpush.bf16.msra.mxu0 %v412
    %522 = vmatpush.bf16.msra.mxu0 %v411
    %523 = vmatpush.bf16.msra.mxu0 %v410
    %524 = vmatpush.bf16.msra.mxu0 %v409
    %525 = vmatpush.bf16.msra.mxu0 %v408
    %526 = vmatpush.bf16.msra.mxu0 %v407
    %527 = vmatpush.bf16.msra.mxu0 %v406
    %528 = vmatmul.bf16.gmra.mxu0 %v91
    %v529 = vpop.f32.mrf.mxu0
    %v530 = vadd.f32 %v516, %v529
    %v531 = vpop.f32.mrf.mxu0
    %v532 = vadd.f32 %v518, %v531
    %533 = vdwg.mxu0
    %534 = vmatpush.bf16.msra.mxu0 %v421
    %535 = vmatpush.bf16.msra.mxu0 %v420
    %536 = vmatpush.bf16.msra.mxu0 %v419
    %537 = vmatpush.bf16.msra.mxu0 %v418
    %538 = vmatpush.bf16.msra.mxu0 %v417
    %539 = vmatpush.bf16.msra.mxu0 %v416
    %540 = vmatpush.bf16.msra.mxu0 %v415
    %541 = vmatpush.bf16.msra.mxu0 %v414
    %542 = vmatmul.bf16.gmra.mxu0 %v92
    %v543 = vpop.f32.mrf.mxu0
    %v544 = vadd.f32 %v530, %v543
    %v545 = vpop.f32.mrf.mxu0
    %v546 = vadd.f32 %v532, %v545
    %547 = vdwg.mxu0
    %548 = vmatpush.bf16.msra.mxu0 %v429
    %549 = vmatpush.bf16.msra.mxu0 %v428
    %550 = vmatpush.bf16.msra.mxu0 %v427
    %551 = vmatpush.bf16.msra.mxu0 %v426
    %552 = vmatpush.bf16.msra.mxu0 %v425
    %553 = vmatpush.bf16.msra.mxu0 %v424
    %554 = vmatpush.bf16.msra.mxu0 %v423
    %555 = vmatpush.bf16.msra.mxu0 %v422
    %556 = vmatmul.bf16.gmra.mxu0 %v93
    %v557 = vpop.f32.mrf.mxu0
    %v558 = vadd.f32 %v544, %v557
    %v559 = vpop.f32.mrf.mxu0
    %v560 = vadd.f32 %v546, %v559
    %561 = vdwg.mxu0
    %v562 = vadd.f32 %v74, %v558
    %v563 = vadd.f32 %v75, %v560
    %564 = vst [vmem:[#allocation2] sm:$0xff] %v562
    %565 = vst [vmem:[#allocation2 + $0x8] sm:$0xff] %v563
    // Predicated region
    $region38: #{tpu_custom_call.1} parent=1 // pred_check
      %p566 = pneg %p68
    $region39: #{tpu_custom_call.1} parent=1 // pred_check_branch
      %568 = sbr.rel (%p566) target = $region41
    $region40: #{tpu_custom_call.1} parent=1 // pred_region
      %v569 = vld [vmem:[#allocation2] sm:$0xff]
      %v570 = vld [vmem:[#allocation2 + $0x8] sm:$0xff]
      %v571 = vld [vmem:[%s2] sm:$0x1]
      %v573 = vperm.slane %v571, 0
      %v575 = vadd.f32 %v569, %v573
      %v576 = vadd.f32 %v570, %v573
      %v577 = vpack.c.bf16 %v576, %v575
      %v578 = vld [vmem:[#allocation8] sm:$0xf]
      %v579 = vld [vmem:[#allocation8 + $0x4] sm:$0xf]
      %v580 = vld [vmem:[#allocation8 + $0x8] sm:$0xf]
      %v581 = vld [vmem:[#allocation8 + $0xc] sm:$0xf]
      %v582 = vld [vmem:[#allocation8 + $0x10] sm:$0xf]
      %v583 = vld [vmem:[#allocation8 + $0x14] sm:$0xf]
      %v584 = vld [vmem:[#allocation8 + $0x18] sm:$0xf]
      %v585 = vld [vmem:[#allocation8 + $0x1c] sm:$0xf]
      %v586 = vld [vmem:[#allocation8 + $0x20] sm:$0xf]
      %v587 = vld [vmem:[#allocation8 + $0x24] sm:$0xf]
      %v588 = vld [vmem:[#allocation8 + $0x28] sm:$0xf]
      %v589 = vld [vmem:[#allocation8 + $0x2c] sm:$0xf]
      %v590 = vld [vmem:[#allocation8 + $0x30] sm:$0xf]
      %v591 = vld [vmem:[#allocation8 + $0x34] sm:$0xf]
      %v592 = vld [vmem:[#allocation8 + $0x38] sm:$0xf]
      %v593 = vld [vmem:[#allocation8 + $0x3c] sm:$0xf]
      %v594 = vld [vmem:[%s4] sm:$0x1]
      %v596 = vperm.slane %v594, 0
      %v614 = vunpack.c.l.b16 %v578
      %v615 = vunpack.c.l.b16 %v579
      %v616 = vunpack.c.l.b16 %v580
      %v617 = vunpack.c.l.b16 %v581
      %v618 = vunpack.c.l.b16 %v582
      %v619 = vunpack.c.l.b16 %v583
      %v620 = vunpack.c.l.b16 %v584
      %v621 = vunpack.c.l.b16 %v585
      %v622 = vunpack.c.l.b16 %v586
      %v623 = vunpack.c.l.b16 %v587
      %v624 = vunpack.c.l.b16 %v588
      %v625 = vunpack.c.l.b16 %v589
      %v626 = vunpack.c.l.b16 %v590
      %v627 = vunpack.c.l.b16 %v591
      %v628 = vunpack.c.l.b16 %v592
      %v629 = vunpack.c.l.b16 %v593
      %v630 = vpack.c.b16 %v615, %v614
      %v631 = vpack.c.b16 %v617, %v616
      %v632 = vpack.c.b16 %v619, %v618
      %v633 = vpack.c.b16 %v621, %v620
      %v634 = vpack.c.b16 %v623, %v622
      %v635 = vpack.c.b16 %v625, %v624
      %v636 = vpack.c.b16 %v627, %v626
      %v637 = vpack.c.b16 %v629, %v628
      %646 = vmatpush.bf16.msra.mxu0 %v637
      %647 = vmatpush.bf16.msra.mxu0 %v636
      %648 = vmatpush.bf16.msra.mxu0 %v635
      %649 = vmatpush.bf16.msra.mxu0 %v634
      %650 = vmatpush.bf16.msra.mxu0 %v633
      %651 = vmatpush.bf16.msra.mxu0 %v632
      %652 = vmatpush.bf16.msra.mxu0 %v631
      %653 = vmatpush.bf16.msra.mxu0 %v630
      %654 = vmatmul.bf16.gmra.mxu0 %v577
      %v655 = vpop.f32.mrf.mxu0
      %v656 = vadd.f32 %v596, %v655
      %v657 = vpop.f32.mrf.mxu0
      %v658 = vadd.f32 %v596, %v657
      %659 = vdwg.mxu0
      %660 = vst [vmem:[#allocation9] sm:$0xff] %v656
      %661 = vst [vmem:[#allocation9 + $0x8] sm:$0xff] %v658
    $region41: #{tpu_custom_call.1} parent=1 // pred_fallthru
      _
    // Predicated region
    $region42: #{tpu_custom_call.1} parent=1 // pred_check
      _
    $region43: #{tpu_custom_call.1} parent=1 // pred_check_branch
      %663 = sbr.rel (0) target = $region45
    $region44: #{tpu_custom_call.1} parent=1 // pred_region
      %665 = vsyncadd [#allocation5], 0
      %s666 = sshll.u32 [#allocation9], 4
      %s667 = int_to_ptr.vmem [resolvable:$true] %s666
      %s668 = sshll.u32 %s5, 4
      %s669 = int_to_ptr.hbm [resolvable:$true] %s668
      %674 = dma.vmem_to_hbm [thread:$0]  %s667, 256, %s669, [#allocation5], 128, 128, 8
    $region45: #{tpu_custom_call.1} parent=1 // pred_fallthru
      _
    // Predicated region
    $region46: #{tpu_custom_call.1} parent=1 // pred_check
      _
    $region47: #{tpu_custom_call.1} parent=1 // pred_check_branch
      %676 = sbr.rel (0) target = $region49
    $region48: #{tpu_custom_call.1} parent=1 // pred_region
      %678 = dma.done [#allocation5], 256
    $region49: #{tpu_custom_call.1} parent=1 // pred_fallthru
      _
    %679 = vsyncpa [#allocation4], 1
    %680 = vsyncpa [#allocation7], 1
    %681 = vsyncpa [#allocation5], 1

</llo_original>
